<compile_context>
chip_gen: v7x
topology: tpu7x:2x2x1
jax: 0.10.0
libtpu: 0.0.40
codegen_flags: <defaults>
</compile_context>

<pallas_src>
from functools import partial

import jax
import jax.numpy as jnp
from jax.experimental import pallas as pl
from jax.experimental.pallas import tpu as pltpu


def _dma_copy_kernel(n_inner: int, p_hbm, o_hbm, sems):
    """Copy chunk-row `program_id(0)` of a (n_outer, n_inner, chunk) HBM array
    straight to the HBM output using `n_inner` overlapping DMAs."""
    i = pl.program_id(0)
    copies = [
        pltpu.make_async_copy(p_hbm.at[i, j], o_hbm.at[i, j], sems.at[j])
        for j in range(n_inner)
    ]
    for cp in copies:   # issue every DMA first ...
        cp.start()
    for cp in copies:   # ... then drain, so the transfers overlap.
        cp.wait()


def _pick_chunking(n_elems: int, total_bytes: int, min_chunk_bytes: int):
    n_outer, n_inner = 1, 1
    if n_elems % 2 == 0 and total_bytes // 2 >= min_chunk_bytes:
        # Grid axis -> can be sharded across v7x's 2 TensorCores ("parallel").
        n_outer = 2
        if (n_elems // n_outer) % 2 == 0 and total_bytes // 4 >= min_chunk_bytes:
            # Two in-flight DMAs per grid step (overlap issue/drain).
            n_inner = 2
    return n_outer, n_inner


def param_store_forward(param: jax.Array,
                        *,
                        small_copy_bytes: int = 1 << 20,
                        min_chunk_bytes: int = 1 << 20) -> jax.Array:
    """Materialize the stored parameter into a fresh buffer.

    Small params take a plain XLA copy (no kernel).  Larger params take an
    HBM->HBM async-DMA Pallas kernel, chunked for TC sharding / DMA overlap.
    """
    orig_shape = param.shape
    dtype = param.dtype
    n_elems = int(param.size)
    total_bytes = n_elems * jnp.dtype(dtype).itemsize

    if n_elems == 0 or total_bytes < small_copy_bytes:
        # pallas_call dispatch overhead would dominate a sub-microsecond copy.
        return jnp.copy(param)

    n_outer, n_inner = _pick_chunking(n_elems, total_bytes, min_chunk_bytes)
    chunk = n_elems // (n_outer * n_inner)

    # Contiguous row-major reshape: pure view of the same element order.
    flat = param.reshape(n_outer, n_inner, chunk)

    out = pl.pallas_call(
        partial(_dma_copy_kernel, n_inner),
        out_shape=jax.ShapeDtypeStruct((n_outer, n_inner, chunk), dtype),
        grid=(n_outer,),
        in_specs=[pl.BlockSpec(memory_space=pl.ANY)],
        out_specs=pl.BlockSpec(memory_space=pl.ANY),
        scratch_shapes=[pltpu.SemaphoreType.DMA((n_inner,))],
        compiler_params=pltpu.CompilerParams(
            # Chunks are independent; lets megacore (v7x: 2 TCs) split the copy.
            dimension_semantics=("parallel",),
        ),
        cost_estimate=pl.CostEstimate(
            flops=0, transcendentals=0, bytes_accessed=2 * total_bytes),
    )(flat)

    return out.reshape(orig_shape)


class ParamStore:
    """JAX/Pallas analogue of tensorkit's ParamStore (SimpleParamStore flavor)."""

    def __init__(self, shape, key, dtype=jnp.float32, small_copy_bytes=1 << 20):
        self.shape = list(map(int, shape))
        self.small_copy_bytes = int(small_copy_bytes)
        # Deterministic parameter init (stand-in for the trainable tensor).
        self._value = jax.random.normal(key, tuple(self.shape), dtype=dtype)

    def get(self, materialize: bool = True):
        if not materialize:
            # Zero-copy fast path: identity semantics need no kernel at all.
            return self._value
        return param_store_forward(self._value,
                                   small_copy_bytes=self.small_copy_bytes)

    def set(self, value):
        self._value = jnp.asarray(value).reshape(tuple(self.shape))

    def __call__(self):  # forward()
        return self.get()


if __name__ == "__main__":
    key = jax.random.PRNGKey(0)

    # 1) Small parameter, default path: XLA-level copy (no kernel overhead).
    store_small = ParamStore([32, 128], key)
    out_small = store_small()
    jax.block_until_ready(out_small)
    assert out_small.shape == (32, 128)
    assert out_small.dtype == jnp.float32
    assert bool(jnp.array_equal(out_small, store_small._value))

    # 2) Force the Pallas HBM->HBM DMA kernel on the same small parameter
    #    (single DMA, grid=(1,)).
    store_kernel = ParamStore([32, 128], key, small_copy_bytes=0)
    out_k = store_kernel()
    jax.block_until_ready(out_k)
    assert bool(jnp.array_equal(out_k, store_kernel._value))

    # 3) Exercise the chunked path (grid=(2,), 2 in-flight DMAs per step) with
    #    small data by lowering the chunking threshold.
    x = jax.random.normal(jax.random.PRNGKey(1), (64, 256), dtype=jnp.float32)
    out_c = param_store_forward(x, small_copy_bytes=0, min_chunk_bytes=1024)
    jax.block_until_ready(out_c)
    assert bool(jnp.array_equal(out_c, x))

    # 4) Non-(8,128)-aligned, higher-rank parameter through the DMA kernel.
    y = jax.random.normal(jax.random.PRNGKey(2), (5, 7, 48), dtype=jnp.float32)
    out_y = param_store_forward(y, small_copy_bytes=0)
    jax.block_until_ready(out_y)
    assert out_y.shape == (5, 7, 48)
    assert bool(jnp.array_equal(out_y, y))

    # 5) Zero-copy non-materialized path returns the stored value directly.
    assert store_small.get(materialize=False) is store_small._value

    print("KERNEL_OK")
</pallas_src>

<mosaic_0001>
module attributes {stable_mosaic.version = 11 : i64} {
  func.func @_dma_copy_kernel(%arg0: i32, %arg1: memref<1x1x4096xf32, #tpu.memory_space<any>>, %arg2: memref<1x1x4096xf32, #tpu.memory_space<any>>, %arg3: memref<1x!tpu.dma_semaphore, #tpu.memory_space<semaphore_mem>>) attributes {dimension_semantics = [#tpu.dimension_semantics<parallel>], iteration_bounds = array<i64: 1>, scalar_prefetch = 0 : i64, scratch_operands = 1 : i64, tpu.core_type = #tpu.core_type<tc>, window_params = [{}, {}]} {
    %c0_i32 = arith.constant 0 : i32
    %c0_i32_0 = arith.constant 0 : i32
    %c0_i32_1 = arith.constant 0 : i32
    %c0_i32_2 = arith.constant 0 : i32
    %0 = tpu.memref_slice %arg1[%arg0, %c0_i32, %c0_i32_2] : memref<1x1x4096xf32, #tpu.memory_space<any>> -> memref<1x1x4096xf32, #tpu.memory_space<any>>
    %1 = tpu.memref_squeeze %0 : memref<1x1x4096xf32, #tpu.memory_space<any>> -> memref<4096xf32, #tpu.memory_space<any>>
    %c0_i32_3 = arith.constant 0 : i32
    %2 = tpu.memref_slice %arg2[%arg0, %c0_i32_0, %c0_i32_3] : memref<1x1x4096xf32, #tpu.memory_space<any>> -> memref<1x1x4096xf32, #tpu.memory_space<any>>
    %3 = tpu.memref_squeeze %2 : memref<1x1x4096xf32, #tpu.memory_space<any>> -> memref<4096xf32, #tpu.memory_space<any>>
    %4 = tpu.memref_slice %arg3[%c0_i32_1] : memref<1x!tpu.dma_semaphore, #tpu.memory_space<semaphore_mem>> -> memref<1x!tpu.dma_semaphore, #tpu.memory_space<semaphore_mem>>
    %5 = tpu.memref_squeeze %4 : memref<1x!tpu.dma_semaphore, #tpu.memory_space<semaphore_mem>> -> memref<!tpu.dma_semaphore, #tpu.memory_space<semaphore_mem>>
    tpu.enqueue_dma source(%1 : memref<4096xf32, #tpu.memory_space<any>>) target(%3 : memref<4096xf32, #tpu.memory_space<any>>) target_semaphore(%5 : memref<!tpu.dma_semaphore, #tpu.memory_space<semaphore_mem>>)
    %c0_i32_4 = arith.constant 0 : i32
    %c0_i32_5 = arith.constant 0 : i32
    %c0_i32_6 = arith.constant 0 : i32
    %c0_i32_7 = arith.constant 0 : i32
    %6 = tpu.memref_slice %arg1[%arg0, %c0_i32_4, %c0_i32_7] : memref<1x1x4096xf32, #tpu.memory_space<any>> -> memref<1x1x4096xf32, #tpu.memory_space<any>>
    %7 = tpu.memref_squeeze %6 : memref<1x1x4096xf32, #tpu.memory_space<any>> -> memref<4096xf32, #tpu.memory_space<any>>
    %c0_i32_8 = arith.constant 0 : i32
    %8 = tpu.memref_slice %arg2[%arg0, %c0_i32_5, %c0_i32_8] : memref<1x1x4096xf32, #tpu.memory_space<any>> -> memref<1x1x4096xf32, #tpu.memory_space<any>>
    %9 = tpu.memref_squeeze %8 : memref<1x1x4096xf32, #tpu.memory_space<any>> -> memref<4096xf32, #tpu.memory_space<any>>
    %10 = tpu.memref_slice %arg3[%c0_i32_6] : memref<1x!tpu.dma_semaphore, #tpu.memory_space<semaphore_mem>> -> memref<1x!tpu.dma_semaphore, #tpu.memory_space<semaphore_mem>>
    %11 = tpu.memref_squeeze %10 : memref<1x!tpu.dma_semaphore, #tpu.memory_space<semaphore_mem>> -> memref<!tpu.dma_semaphore, #tpu.memory_space<semaphore_mem>>
    tpu.wait_dma2 semaphore(%11 : memref<!tpu.dma_semaphore, #tpu.memory_space<semaphore_mem>>) src(%7 : memref<4096xf32, #tpu.memory_space<any>>) dst(%9 : memref<4096xf32, #tpu.memory_space<any>>)
    return
  }
}

</mosaic_0001>

<llo_original>
// kernel: tpu_custom_call.1
$region0: #{tpu_custom_call.1}
  #allocation0 [shape = 'u32[]', space=smem, size = 0x4, offset = 0x4, fixed_abs, tag = 'smem constant byte address 0x4 - core index']
  #allocation1 [shape = 'u32[144,128]{1,0:T(1,128)}', space=vmem, size = 0x12000, scoped, tag = 'internal scratch']
  #allocation2 [shape = 's32[1]{0}', space=sflag, size = 0x4, scoped, tag = 'scratch operand']
  #allocation3 [shape = 's32[]', space=sflag, size = 0x4, offset = 0, fixed_abs, tag = 'sflag constant byte address 0x0 - dummy sync flag']
  #allocation4 [shape = 'u32[0]{0}', space=smem, size = 0, offset = 0, fixed_abs, tag = 'smem constant byte address 0x0 - null']
  %s0 = inlined_call_operand.hbm [shape: f32[1,1,4096], index: 0, kind: input, shape index: {}]
  %s1 = inlined_call_operand.hbm [shape: f32[1,1,4096], index: 1, kind: output, shape index: {}]
  %s2 = sld [smem:[#allocation0]]
  $region2: #{tpu_custom_call.1} parent=0
    _
  %s4 = ssub.s32 1, %s2
  %s5 = scalar_select 0, %s4, %s2
  %s6 = smul.u32 0, 32
  %s7 = smul.addr %s6, 16
  %s8 = scalar_lea.hbm %s0, %s7
  %s9 = smul.addr %s6, 16
  %s10 = scalar_lea.hbm %s1, %s9
  %s12 = sshll.u32 1, 14
  %s13 = sxor.u32 4294967295, %s12
  %s16 = sshll.u32 3, 24
  %s17 = sxor.u32 4294967295, %s16
  %s18 = sand.u32 0, %s17
  %s20 = sor.u32 %s18, 0
  %23 = dma.general %s8, 512, %s10, [#allocation2], [#allocation3], [#allocation4], %s20, 0
  %25 = dma.done [#allocation2], 512
  %26 = vsyncmov [#allocation2]
  %s27 = vpop.sfrf %26
  %p28 = scmp.eq.s32.totalorder %s27, 0
  %p29 = pneg %p28
  %31 = shalt.err (%p29)

</llo_original>
